<compile_context>
chip_gen: v5e
topology: v5e:2x2
jax: 0.10.0
libtpu: 0.0.40
codegen_flags: <defaults>
</compile_context>

<pallas_src>
import jax
import jax.numpy as jnp
from jax.experimental import pallas as pl
from jax.experimental.pallas import tpu as pltpu


def _round_up(n, m):
    return -(-n // m) * m


def critic_kernel(x_ref,
                  w1_ref, b1_ref,
                  w2_ref, b2_ref,
                  w3_ref, b3_ref,
                  w4_ref, b4_ref,
                  out_ref):
    # x tile: [S, TB] (batch on lanes). Canonical MXU matmuls: W [out, in] @ x [in, TB].
    h = jnp.dot(w1_ref[...], x_ref[...],
                preferred_element_type=jnp.float32) + b1_ref[...]
    h = jnp.maximum(h, 0.0)                                              # [64, TB] f32
    h = jnp.dot(w2_ref[...], h.astype(w2_ref.dtype),
                preferred_element_type=jnp.float32) + b2_ref[...]
    h = jnp.maximum(h, 0.0)                                              # [32, TB] f32
    h = jnp.dot(w3_ref[...], h.astype(w3_ref.dtype),
                preferred_element_type=jnp.float32) + b3_ref[...]
    h = jnp.maximum(h, 0.0)                                              # [16, TB] f32
    # Final 16 -> 1 head on VPU + XLU: broadcast-mul by the [16, 1] w4 column, then a
    # sublane reduce. Lane-dense [1, TB] result -> unmasked stores.
    v = jnp.sum(h * w4_ref[...], axis=0, keepdims=True) + b4_ref[...]
    out_ref[...] = v.astype(out_ref.dtype)


def _vmem_budget_bytes(tb, state_dim, mxu_bytes):
    # 2x-buffered [S, TB] x tile + lane-dense f32 activations + 2x resident weights/biases
    # + 2x-buffered [1, TB] output row, with 2x headroom. Clamped to 24 MiB so it stays
    # comfortably inside v7x's 64 MiB physical VMEM (and the 32 MiB scoped default).
    lane, sub, f32 = 128, 8, 4
    pad = lambda n, m: _round_up(n, m)
    x_tile = 2 * pad(state_dim, sub) * tb * mxu_bytes
    acts = (pad(64, sub) + pad(32, sub) + pad(16, sub) + sub) * tb * f32
    out = 2 * sub * tb * f32
    w_res = sum(pad(a, sub) * pad(b, lane) * mxu_bytes
                for a, b in [(64, state_dim), (32, 64), (16, 32)])
    b_res = sum(pad(a, sub) * lane * f32 for a in (64, 32, 16))
    head = (pad(16, sub) + sub) * lane * f32
    total = x_tile + acts + out + 2 * (w_res + b_res + head)
    return int(max(4 << 20, min(2 * total, 24 << 20)))


def critic_forward(state, params, *, block_batch=2048, mxu_dtype=jnp.float32):
    """state: [B, state_dim] float32 -> value: [B, 1] float32.

    block_batch: target batch-tile size (multiple of 256 recommended). The actual tile is
    sized from B so padding waste stays <= one 128-row sliver per tile.
    mxu_dtype: dtype fed to the MXU matmuls (jnp.bfloat16 recommended on v6e/v7x; bias /
    ReLU / head math stays float32 regardless).
    """
    (w1, b1), (w2, b2), (w3, b3), (w4, b4) = params
    B, S = state.shape

    # Size tb from B for a target number of tiles (bounds padding waste while keeping the
    # large-tile amortization). On v7x prefer block_batch small enough that n_tiles >= 2
    # (even) so both TensorCores are used via the "parallel" grid axis.
    n_tiles = max(1, pl.cdiv(B, block_batch))
    tb = _round_up(pl.cdiv(B, n_tiles), 128)
    b_pad = n_tiles * tb

    # Wrapper-side layout plumbing: batch onto the lane axis ([S, b_pad]); MXU operands
    # optionally cast to bf16 (halves x DMA bytes); w4 as a [16, 1] f32 column for the
    # VPU head; biases stay f32 columns.
    x = state.T
    if b_pad != B:
        x = jnp.pad(x, ((0, 0), (0, b_pad - B)))
    x = x.astype(mxu_dtype)
    w1m, w2m, w3m = (w.astype(mxu_dtype) for w in (w1, w2, w3))
    w4_col = w4.T.astype(jnp.float32)                       # [16, 1]

    x_spec = pl.BlockSpec((S, tb), lambda i: (0, i))

    def resident(arr):  # full-array block, constant index_map -> stays VMEM-resident
        return pl.BlockSpec(arr.shape, lambda i: (0, 0))

    out_spec = pl.BlockSpec((1, tb), lambda i: (0, i))       # lane-dense output slab

    mxu_bytes = jnp.dtype(mxu_dtype).itemsize
    out_row = pl.pallas_call(
        critic_kernel,
        out_shape=jax.ShapeDtypeStruct((1, b_pad), jnp.float32),
        grid=(n_tiles,),
        in_specs=[x_spec,
                  resident(w1m), resident(b1),
                  resident(w2m), resident(b2),
                  resident(w3m), resident(b3),
                  resident(w4_col), resident(b4)],
        out_specs=out_spec,
        compiler_params=pltpu.CompilerParams(
            dimension_semantics=("parallel",),
            vmem_limit_bytes=_vmem_budget_bytes(tb, S, mxu_bytes)),
    )(x, w1m, b1, w2m, b2, w3m, b3, w4_col, b4)

    # [1, b_pad] lane-dense row -> [B, 1] column (padded garbage rows sliced off).
    return out_row.reshape(b_pad, 1)[:B]


def init_linear(key, fan_in, fan_out):
    # Mirrors torch.nn.Linear default init: U(-1/sqrt(fan_in), 1/sqrt(fan_in)).
    # Weight stored [out, in] (PyTorch layout); bias stored [out, 1].
    kw, kb = jax.random.split(key)
    bound = 1.0 / jnp.sqrt(jnp.float32(fan_in))
    w = jax.random.uniform(kw, (fan_out, fan_in), jnp.float32, -bound, bound)
    b = jax.random.uniform(kb, (fan_out, 1), jnp.float32, -bound, bound)
    return w, b


def _reference(state, params):
    ref = state
    for i, (w, b) in enumerate(params):
        ref = ref @ w.T + b.T
        if i < 3:
            ref = jnp.maximum(ref, 0.0)
    return ref


if __name__ == "__main__":
    state_dim = 8

    key = jax.random.PRNGKey(0)
    k_x, k_x2, k1, k2, k3, k4 = jax.random.split(key, 6)

    params = (
        init_linear(k1, state_dim, 64),
        init_linear(k2, 64, 32),
        init_linear(k3, 32, 16),
        init_linear(k4, 16, 1),
    )

    # Small demo batch (f32 MXU path; exact parity with the f32 reference).
    state = jax.random.normal(k_x, (4, state_dim), jnp.float32)
    v = jax.block_until_ready(critic_forward(state, params))
    assert v.shape == (4, 1)
    assert jnp.allclose(v, _reference(state, params), atol=1e-5, rtol=1e-5)

    # Multi-tile grid path (resident weights + lane-offset output writes, padded last tile).
    state_big = jax.random.normal(k_x2, (260, state_dim), jnp.float32)
    ref_big = _reference(state_big, params)
    v_big = jax.block_until_ready(
        critic_forward(state_big, params, block_batch=128))
    assert v_big.shape == (260, 1)
    assert jnp.allclose(v_big, ref_big, atol=1e-5, rtol=1e-5)

    # bf16 MXU-operand path (v6e/v7x optimization); parity vs f32 reference is loose.
    v_bf16 = jax.block_until_ready(
        critic_forward(state_big, params, block_batch=128, mxu_dtype=jnp.bfloat16))
    assert v_bf16.shape == (260, 1)
    assert jnp.allclose(v_bf16, ref_big, atol=5e-2, rtol=5e-2)

    print("KERNEL_OK")
</pallas_src>

<mosaic_0001>
module attributes {stable_mosaic.version = 11 : i64} {
  func.func @critic_kernel(%arg0: i32, %arg1: memref<8x128xf32, #tpu.memory_space<vmem>>, %arg2: memref<64x8xf32, #tpu.memory_space<vmem>>, %arg3: memref<64x1xf32, #tpu.memory_space<vmem>>, %arg4: memref<32x64xf32, #tpu.memory_space<vmem>>, %arg5: memref<32x1xf32, #tpu.memory_space<vmem>>, %arg6: memref<16x32xf32, #tpu.memory_space<vmem>>, %arg7: memref<16x1xf32, #tpu.memory_space<vmem>>, %arg8: memref<16x1xf32, #tpu.memory_space<vmem>>, %arg9: memref<1x1xf32, #tpu.memory_space<vmem>>, %arg10: memref<1x128xf32, #tpu.memory_space<vmem>>) attributes {dimension_semantics = [#tpu.dimension_semantics<parallel>], iteration_bounds = array<i64: 1>, scalar_prefetch = 0 : i64, scratch_operands = 0 : i64, tpu.core_type = #tpu.core_type<tc>, window_params = [{transform_indices = @transform_0, window_bounds = array<i64: 8, 128>}, {pipeline_mode = #tpu.pipeline_mode<synchronous>, transform_indices = @transform_1, window_bounds = array<i64: 64, 8>}, {pipeline_mode = #tpu.pipeline_mode<synchronous>, transform_indices = @transform_2, window_bounds = array<i64: 64, 1>}, {pipeline_mode = #tpu.pipeline_mode<synchronous>, transform_indices = @transform_3, window_bounds = array<i64: 32, 64>}, {pipeline_mode = #tpu.pipeline_mode<synchronous>, transform_indices = @transform_4, window_bounds = array<i64: 32, 1>}, {pipeline_mode = #tpu.pipeline_mode<synchronous>, transform_indices = @transform_5, window_bounds = array<i64: 16, 32>}, {pipeline_mode = #tpu.pipeline_mode<synchronous>, transform_indices = @transform_6, window_bounds = array<i64: 16, 1>}, {pipeline_mode = #tpu.pipeline_mode<synchronous>, transform_indices = @transform_7, window_bounds = array<i64: 16, 1>}, {pipeline_mode = #tpu.pipeline_mode<synchronous>, transform_indices = @transform_8, window_bounds = array<i64: 1, 1>}, {transform_indices = @transform_9, window_bounds = array<i64: 1, 128>}]} {
    %c0 = arith.constant 0 : index
    %c0_0 = arith.constant 0 : index
    %0 = vector.load %arg2[%c0, %c0_0] : memref<64x8xf32, #tpu.memory_space<vmem>>, vector<64x8xf32>
    %c0_1 = arith.constant 0 : index
    %c0_2 = arith.constant 0 : index
    %1 = vector.load %arg1[%c0_1, %c0_2] : memref<8x128xf32, #tpu.memory_space<vmem>>, vector<8x128xf32>
    %cst = arith.constant dense<0.000000e+00> : vector<64x128xf32>
    %2 = tpu.matmul %0, %1, %cst {dimension_numbers = #tpu.dot_dimension_numbers<[1], [0], [0], [1], [0, 0, 1, 1], [], []>} : vector<64x8xf32>, vector<8x128xf32>, vector<64x128xf32> -> vector<64x128xf32>
    %c0_3 = arith.constant 0 : index
    %c0_4 = arith.constant 0 : index
    %3 = vector.load %arg3[%c0_3, %c0_4] : memref<64x1xf32, #tpu.memory_space<vmem>>, vector<64x1xf32>
    %4 = vector.broadcast %3 : vector<64x1xf32> to vector<64x128xf32>
    %5 = arith.addf %2, %4 : vector<64x128xf32>
    %cst_5 = arith.constant 0.000000e+00 : f32
    %6 = vector.broadcast %cst_5 : f32 to vector<64x128xf32>
    %7 = arith.maximumf %5, %6 : vector<64x128xf32>
    %c0_6 = arith.constant 0 : index
    %c0_7 = arith.constant 0 : index
    %8 = vector.load %arg4[%c0_6, %c0_7] : memref<32x64xf32, #tpu.memory_space<vmem>>, vector<32x64xf32>
    %cst_8 = arith.constant dense<0.000000e+00> : vector<32x128xf32>
    %9 = tpu.matmul %8, %7, %cst_8 {dimension_numbers = #tpu.dot_dimension_numbers<[1], [0], [0], [1], [0, 0, 1, 1], [], []>} : vector<32x64xf32>, vector<64x128xf32>, vector<32x128xf32> -> vector<32x128xf32>
    %c0_9 = arith.constant 0 : index
    %c0_10 = arith.constant 0 : index
    %10 = vector.load %arg5[%c0_9, %c0_10] : memref<32x1xf32, #tpu.memory_space<vmem>>, vector<32x1xf32>
    %11 = vector.broadcast %10 : vector<32x1xf32> to vector<32x128xf32>
    %12 = arith.addf %9, %11 : vector<32x128xf32>
    %cst_11 = arith.constant 0.000000e+00 : f32
    %13 = vector.broadcast %cst_11 : f32 to vector<32x128xf32>
    %14 = arith.maximumf %12, %13 : vector<32x128xf32>
    %c0_12 = arith.constant 0 : index
    %c0_13 = arith.constant 0 : index
    %15 = vector.load %arg6[%c0_12, %c0_13] : memref<16x32xf32, #tpu.memory_space<vmem>>, vector<16x32xf32>
    %cst_14 = arith.constant dense<0.000000e+00> : vector<16x128xf32>
    %16 = tpu.matmul %15, %14, %cst_14 {dimension_numbers = #tpu.dot_dimension_numbers<[1], [0], [0], [1], [0, 0, 1, 1], [], []>} : vector<16x32xf32>, vector<32x128xf32>, vector<16x128xf32> -> vector<16x128xf32>
    %c0_15 = arith.constant 0 : index
    %c0_16 = arith.constant 0 : index
    %17 = vector.load %arg7[%c0_15, %c0_16] : memref<16x1xf32, #tpu.memory_space<vmem>>, vector<16x1xf32>
    %18 = vector.broadcast %17 : vector<16x1xf32> to vector<16x128xf32>
    %19 = arith.addf %16, %18 : vector<16x128xf32>
    %cst_17 = arith.constant 0.000000e+00 : f32
    %20 = vector.broadcast %cst_17 : f32 to vector<16x128xf32>
    %21 = arith.maximumf %19, %20 : vector<16x128xf32>
    %c0_18 = arith.constant 0 : index
    %c0_19 = arith.constant 0 : index
    %22 = vector.load %arg8[%c0_18, %c0_19] : memref<16x1xf32, #tpu.memory_space<vmem>>, vector<16x1xf32>
    %23 = vector.broadcast %22 : vector<16x1xf32> to vector<16x128xf32>
    %24 = arith.mulf %21, %23 : vector<16x128xf32>
    %cst_20 = arith.constant dense<0.000000e+00> : vector<128xf32>
    %25 = vector.multi_reduction <add>, %24, %cst_20 [0] : vector<16x128xf32> to vector<128xf32>
    %26 = vector.shape_cast %25 : vector<128xf32> to vector<1x128xf32>
    %c0_21 = arith.constant 0 : index
    %c0_22 = arith.constant 0 : index
    %27 = vector.load %arg9[%c0_21, %c0_22] : memref<1x1xf32, #tpu.memory_space<vmem>>, vector<1x1xf32>
    %28 = vector.broadcast %27 : vector<1x1xf32> to vector<1x128xf32>
    %29 = arith.addf %26, %28 : vector<1x128xf32>
    %c0_23 = arith.constant 0 : index
    %c0_24 = arith.constant 0 : index
    %30 = vector.load %arg10[%c0_23, %c0_24] : memref<1x128xf32, #tpu.memory_space<vmem>>, vector<1x128xf32>
    tpu.vector_store %arg10[%c0_23, %c0_24], %29 {strides = array<i32>} : memref<1x128xf32, #tpu.memory_space<vmem>>, vector<1x128xf32>,
    return
  }
  func.func @transform_0(%arg0: i32) -> (i32, i32) {
    %c0_i32 = arith.constant 0 : i32
    %c0_i32_0 = arith.constant 0 : i32
    return %c0_i32, %arg0 : i32, i32
  }
  func.func @transform_1(%arg0: i32) -> (i32, i32) {
    %c0_i32 = arith.constant 0 : i32
    %c0_i32_0 = arith.constant 0 : i32
    %c0_i32_1 = arith.constant 0 : i32
    return %c0_i32, %c0_i32_0 : i32, i32
  }
  func.func @transform_2(%arg0: i32) -> (i32, i32) {
    %c0_i32 = arith.constant 0 : i32
    %c0_i32_0 = arith.constant 0 : i32
    %c0_i32_1 = arith.constant 0 : i32
    return %c0_i32, %c0_i32_0 : i32, i32
  }
  func.func @transform_3(%arg0: i32) -> (i32, i32) {
    %c0_i32 = arith.constant 0 : i32
    %c0_i32_0 = arith.constant 0 : i32
    %c0_i32_1 = arith.constant 0 : i32
    return %c0_i32, %c0_i32_0 : i32, i32
  }
  func.func @transform_4(%arg0: i32) -> (i32, i32) {
    %c0_i32 = arith.constant 0 : i32
    %c0_i32_0 = arith.constant 0 : i32
    %c0_i32_1 = arith.constant 0 : i32
    return %c0_i32, %c0_i32_0 : i32, i32
  }
  func.func @transform_5(%arg0: i32) -> (i32, i32) {
    %c0_i32 = arith.constant 0 : i32
    %c0_i32_0 = arith.constant 0 : i32
    %c0_i32_1 = arith.constant 0 : i32
    return %c0_i32, %c0_i32_0 : i32, i32
  }
  func.func @transform_6(%arg0: i32) -> (i32, i32) {
    %c0_i32 = arith.constant 0 : i32
    %c0_i32_0 = arith.constant 0 : i32
    %c0_i32_1 = arith.constant 0 : i32
    return %c0_i32, %c0_i32_0 : i32, i32
  }
  func.func @transform_7(%arg0: i32) -> (i32, i32) {
    %c0_i32 = arith.constant 0 : i32
    %c0_i32_0 = arith.constant 0 : i32
    %c0_i32_1 = arith.constant 0 : i32
    return %c0_i32, %c0_i32_0 : i32, i32
  }
  func.func @transform_8(%arg0: i32) -> (i32, i32) {
    %c0_i32 = arith.constant 0 : i32
    %c0_i32_0 = arith.constant 0 : i32
    %c0_i32_1 = arith.constant 0 : i32
    return %c0_i32, %c0_i32_0 : i32, i32
  }
  func.func @transform_9(%arg0: i32) -> (i32, i32) {
    %c0_i32 = arith.constant 0 : i32
    %c0_i32_0 = arith.constant 0 : i32
    return %c0_i32, %arg0 : i32, i32
  }
}

</mosaic_0001>

<llo_original>
// kernel: tpu_custom_call.1
$region0: #{tpu_custom_call.1}
  #allocation0 [shape = 'u32[]', space=smem, size = 0x4, offset = 0x4, fixed_abs, tag = 'smem constant byte address 0x4 - core index']
  #allocation1 [shape = 'u32[72,128]{1,0:T(1,128)}', space=vmem, size = 0x9000, scoped, tag = 'internal scratch']
  #allocation2 [shape = 'f32[1,1]{1,0:T(1,128)S(1)}', space=vmem, size = 0x200, scoped, tag = 'scoped memory for tpu_custom_call.1']
  %s0 = inlined_call_operand.vmem [shape: f32[8,128], index: 0, kind: input, shape index: {}]
  %s1 = inlined_call_operand.vmem [shape: f32[64,8], index: 1, kind: input, shape index: {}]
  %s2 = inlined_call_operand.vmem [shape: f32[64,1], index: 2, kind: input, shape index: {}]
  %s3 = inlined_call_operand.vmem [shape: f32[32,64], index: 3, kind: input, shape index: {}]
  %s4 = inlined_call_operand.vmem [shape: f32[32,1], index: 4, kind: input, shape index: {}]
  %s5 = inlined_call_operand.vmem [shape: f32[16,32], index: 5, kind: input, shape index: {}]
  %s6 = inlined_call_operand.vmem [shape: f32[16,1], index: 6, kind: input, shape index: {}]
  %s7 = inlined_call_operand.vmem [shape: f32[16,1], index: 7, kind: input, shape index: {}]
  %s8 = inlined_call_operand.<no memory space> [shape: f32[1,1], index: 8, kind: input, shape index: {}]
  %s9 = inlined_call_operand.hbm [shape: f32[1,128], index: 9, kind: output, shape index: {}]
  %s10 = sld [smem:[#allocation0]]
  $region46: #{tpu_custom_call.1} parent=0
    _
  %s12 = ssub.s32 1, %s10
  %s13 = scalar_select 0, %s12, %s10
  %v14 = vstv %s8
  %15 = vst [vmem:[#allocation2] sm:$0x1] %v14
  $region1: #{tpu_custom_call.1} parent=0
    #allocation3 [shape = 'u8[512]{0}', space=vmem, size = 0x400, scoped, tag = 'output window, operand 0, single buffered']
    #allocation4 [shape = 's32[1]{0}', space=sflag, size = 0x4, scoped, tag = 'scoped memory for tpu_custom_call.1']
    %16 = vsyncpa [#allocation4], 0
    // Predicated region
    $region2: #{tpu_custom_call.1} parent=1 // pred_check
      _
    $region3: #{tpu_custom_call.1} parent=1 // pred_check_branch
      %18 = sbr.rel (0) target = $region5
    $region4: #{tpu_custom_call.1} parent=1 // pred_region
      _
    $region5: #{tpu_custom_call.1} parent=1 // pred_fallthru
      _
    // Predicated region
    $region6: #{tpu_custom_call.1} parent=1 // pred_check
      _
    $region7: #{tpu_custom_call.1} parent=1 // pred_check_branch
      %20 = sbr.rel (0) target = $region9
    $region8: #{tpu_custom_call.1} parent=1 // pred_region
      _
    $region9: #{tpu_custom_call.1} parent=1 // pred_fallthru
      _
    // Predicated region
    $region10: #{tpu_custom_call.1} parent=1 // pred_check
      _
    $region11: #{tpu_custom_call.1} parent=1 // pred_check_branch
      %22 = sbr.rel (0) target = $region13
    $region12: #{tpu_custom_call.1} parent=1 // pred_region
      _
    $region13: #{tpu_custom_call.1} parent=1 // pred_fallthru
      _
    // Predicated region
    $region14: #{tpu_custom_call.1} parent=1 // pred_check
      _
    $region15: #{tpu_custom_call.1} parent=1 // pred_check_branch
      %24 = sbr.rel (0) target = $region17
    $region16: #{tpu_custom_call.1} parent=1 // pred_region
      _
    $region17: #{tpu_custom_call.1} parent=1 // pred_fallthru
      _
    // Predicated region
    $region18: #{tpu_custom_call.1} parent=1 // pred_check
      _
    $region19: #{tpu_custom_call.1} parent=1 // pred_check_branch
      %26 = sbr.rel (0) target = $region21
    $region20: #{tpu_custom_call.1} parent=1 // pred_region
      _
    $region21: #{tpu_custom_call.1} parent=1 // pred_fallthru
      _
    // Predicated region
    $region22: #{tpu_custom_call.1} parent=1 // pred_check
      _
    $region23: #{tpu_custom_call.1} parent=1 // pred_check_branch
      %28 = sbr.rel (0) target = $region25
    $region24: #{tpu_custom_call.1} parent=1 // pred_region
      _
    $region25: #{tpu_custom_call.1} parent=1 // pred_fallthru
      _
    // Predicated region
    $region26: #{tpu_custom_call.1} parent=1 // pred_check
      _
    $region27: #{tpu_custom_call.1} parent=1 // pred_check_branch
      %30 = sbr.rel (0) target = $region29
    $region28: #{tpu_custom_call.1} parent=1 // pred_region
      _
    $region29: #{tpu_custom_call.1} parent=1 // pred_fallthru
      _
    // Predicated region
    $region30: #{tpu_custom_call.1} parent=1 // pred_check
      _
    $region31: #{tpu_custom_call.1} parent=1 // pred_check_branch
      %32 = sbr.rel (0) target = $region33
    $region32: #{tpu_custom_call.1} parent=1 // pred_region
      _
    $region33: #{tpu_custom_call.1} parent=1 // pred_fallthru
      _
    // Predicated region
    $region34: #{tpu_custom_call.1} parent=1 // pred_check
      _
    $region35: #{tpu_custom_call.1} parent=1 // pred_check_branch
      %34 = sbr.rel (0) target = $region37
    $region36: #{tpu_custom_call.1} parent=1 // pred_region
      _
    $region37: #{tpu_custom_call.1} parent=1 // pred_fallthru
      _
    %v35 = vld [vmem:[%s1] sm:$0xff]
    %v36 = vld [vmem:[%s1 + $0x8] sm:$0xff]
    %v37 = vld [vmem:[%s1 + $0x10] sm:$0xff]
    %v38 = vld [vmem:[%s1 + $0x18] sm:$0xff]
    %v39 = vld [vmem:[%s1 + $0x20] sm:$0xff]
    %v40 = vld [vmem:[%s1 + $0x28] sm:$0xff]
    %v41 = vld [vmem:[%s1 + $0x30] sm:$0xff]
    %v42 = vld [vmem:[%s1 + $0x38] sm:$0xff]
    %v43 = vld [vmem:[%s0] sm:$0xff]
    %v44 = vld [vmem:[%s2] sm:$0xff]
    %v45 = vld [vmem:[%s2 + $0x8] sm:$0xff]
    %v46 = vld [vmem:[%s2 + $0x10] sm:$0xff]
    %v47 = vld [vmem:[%s2 + $0x18] sm:$0xff]
    %v48 = vld [vmem:[%s2 + $0x20] sm:$0xff]
    %v49 = vld [vmem:[%s2 + $0x28] sm:$0xff]
    %v50 = vld [vmem:[%s2 + $0x30] sm:$0xff]
    %v51 = vld [vmem:[%s2 + $0x38] sm:$0xff]
    %53 = vset.pattern.permute.xlu0 0
    %54 = vperm.xlu0 %53, %v44
    %v55 = vpop.permute.xlu0 %54
    %58 = vset.pattern.permute.xlu0 0
    %59 = vperm.xlu0 %58, %v45
    %v60 = vpop.permute.xlu0 %59
    %63 = vset.pattern.permute.xlu0 0
    %64 = vperm.xlu0 %63, %v46
    %v65 = vpop.permute.xlu0 %64
    %68 = vset.pattern.permute.xlu0 0
    %69 = vperm.xlu0 %68, %v47
    %v70 = vpop.permute.xlu0 %69
    %73 = vset.pattern.permute.xlu0 0
    %74 = vperm.xlu0 %73, %v48
    %v75 = vpop.permute.xlu0 %74
    %78 = vset.pattern.permute.xlu0 0
    %79 = vperm.xlu0 %78, %v49
    %v80 = vpop.permute.xlu0 %79
    %83 = vset.pattern.permute.xlu0 0
    %84 = vperm.xlu0 %83, %v50
    %v85 = vpop.permute.xlu0 %84
    %88 = vset.pattern.permute.xlu0 0
    %89 = vperm.xlu0 %88, %v51
    %v90 = vpop.permute.xlu0 %89
    %vm92 = vcmask 64512
    %v94 = vsel %vm92, %v35, 0
    %v97 = vsel %vm92, %v36, 0
    %v100 = vsel %vm92, %v37, 0
    %v103 = vsel %vm92, %v38, 0
    %v106 = vsel %vm92, %v39, 0
    %v109 = vsel %vm92, %v40, 0
    %v112 = vsel %vm92, %v41, 0
    %v115 = vsel %vm92, %v42, 0
    %117 = vmatpush.msra.mxu0 0.0
    %118 = vmatpush.msra.mxu0 0.0
    %119 = vmatpush.msra.mxu0 0.0
    %120 = vmatpush.msra.mxu0 0.0
    %121 = vmatpush.msra.mxu0 0.0
    %122 = vmatpush.msra.mxu0 0.0
    %123 = vmatpush.msra.mxu0 0.0
    %124 = vmatpush.msra.mxu0 0.0
    %125 = vmatpush.msra.mxu0 0.0
    %126 = vmatpush.msra.mxu0 0.0
    %127 = vmatpush.msra.mxu0 0.0
    %128 = vmatpush.msra.mxu0 0.0
    %129 = vmatpush.msra.mxu0 0.0
    %130 = vmatpush.msra.mxu0 0.0
    %131 = vmatpush.msra.mxu0 0.0
    %132 = vmatpush.msra.mxu0 %v43
    %133 = vmatmul.f32.gmra.mxu0 %v94
    %v134 = vpop.f32.mrf.mxu0
    %v135 = vadd.f32 %v55, %v134
    %136 = vmatmul.f32.gmra.mxu0 %v97
    %v137 = vpop.f32.mrf.mxu0
    %v138 = vadd.f32 %v60, %v137
    %139 = vmatmul.f32.gmra.mxu0 %v100
    %v140 = vpop.f32.mrf.mxu0
    %v141 = vadd.f32 %v65, %v140
    %142 = vmatmul.f32.gmra.mxu0 %v103
    %v143 = vpop.f32.mrf.mxu0
    %v144 = vadd.f32 %v70, %v143
    %145 = vmatmul.f32.gmra.mxu0 %v106
    %v146 = vpop.f32.mrf.mxu0
    %v147 = vadd.f32 %v75, %v146
    %148 = vmatmul.f32.gmra.mxu0 %v109
    %v149 = vpop.f32.mrf.mxu0
    %v150 = vadd.f32 %v80, %v149
    %151 = vmatmul.f32.gmra.mxu0 %v112
    %v152 = vpop.f32.mrf.mxu0
    %v153 = vadd.f32 %v85, %v152
    %154 = vmatmul.f32.gmra.mxu0 %v115
    %v155 = vpop.f32.mrf.mxu0
    %v156 = vadd.f32 %v90, %v155
    %157 = vdwg.mxu0
    %v158 = vmax.f32 %v135, 0.0
    %v159 = vmax.f32 %v138, 0.0
    %v160 = vmax.f32 %v141, 0.0
    %v161 = vmax.f32 %v144, 0.0
    %v162 = vmax.f32 %v147, 0.0
    %v163 = vmax.f32 %v150, 0.0
    %v164 = vmax.f32 %v153, 0.0
    %v165 = vmax.f32 %v156, 0.0
    %v166 = vld [vmem:[%s3] sm:$0xff]
    %v167 = vld [vmem:[%s3 + $0x8] sm:$0xff]
    %v168 = vld [vmem:[%s3 + $0x10] sm:$0xff]
    %v169 = vld [vmem:[%s3 + $0x18] sm:$0xff]
    %v170 = vld [vmem:[%s4] sm:$0xff]
    %v171 = vld [vmem:[%s4 + $0x8] sm:$0xff]
    %v172 = vld [vmem:[%s4 + $0x10] sm:$0xff]
    %v173 = vld [vmem:[%s4 + $0x18] sm:$0xff]
    %175 = vset.pattern.permute.xlu0 0
    %176 = vperm.xlu0 %175, %v170
    %v177 = vpop.permute.xlu0 %176
    %180 = vset.pattern.permute.xlu0 0
    %181 = vperm.xlu0 %180, %v171
    %v182 = vpop.permute.xlu0 %181
    %185 = vset.pattern.permute.xlu0 0
    %186 = vperm.xlu0 %185, %v172
    %v187 = vpop.permute.xlu0 %186
    %190 = vset.pattern.permute.xlu0 0
    %191 = vperm.xlu0 %190, %v173
    %v192 = vpop.permute.xlu0 %191
    %vm194 = vcmask 523264
    %v196 = vsel %vm194, %v166, 0
    %v199 = vsel %vm194, %v167, 0
    %v202 = vsel %vm194, %v168, 0
    %v205 = vsel %vm194, %v169, 0
    %207 = vmatpush.msra.mxu0 0.0
    %208 = vmatpush.msra.mxu0 0.0
    %209 = vmatpush.msra.mxu0 0.0
    %210 = vmatpush.msra.mxu0 0.0
    %211 = vmatpush.msra.mxu0 0.0
    %212 = vmatpush.msra.mxu0 0.0
    %213 = vmatpush.msra.mxu0 0.0
    %214 = vmatpush.msra.mxu0 0.0
    %215 = vmatpush.msra.mxu0 %v165
    %216 = vmatpush.msra.mxu0 %v164
    %217 = vmatpush.msra.mxu0 %v163
    %218 = vmatpush.msra.mxu0 %v162
    %219 = vmatpush.msra.mxu0 %v161
    %220 = vmatpush.msra.mxu0 %v160
    %221 = vmatpush.msra.mxu0 %v159
    %222 = vmatpush.msra.mxu0 %v158
    %223 = vmatmul.f32.gmra.mxu0 %v196
    %v224 = vpop.f32.mrf.mxu0
    %v225 = vadd.f32 %v177, %v224
    %226 = vmatmul.f32.gmra.mxu0 %v199
    %v227 = vpop.f32.mrf.mxu0
    %v228 = vadd.f32 %v182, %v227
    %229 = vmatmul.f32.gmra.mxu0 %v202
    %v230 = vpop.f32.mrf.mxu0
    %v231 = vadd.f32 %v187, %v230
    %232 = vmatmul.f32.gmra.mxu0 %v205
    %v233 = vpop.f32.mrf.mxu0
    %v234 = vadd.f32 %v192, %v233
    %235 = vdwg.mxu0
    %v236 = vmax.f32 %v225, 0.0
    %v237 = vmax.f32 %v228, 0.0
    %v238 = vmax.f32 %v231, 0.0
    %v239 = vmax.f32 %v234, 0.0
    %v240 = vld [vmem:[%s5] sm:$0xff]
    %v241 = vld [vmem:[%s5 + $0x8] sm:$0xff]
    %v242 = vld [vmem:[%s6] sm:$0xff]
    %v243 = vld [vmem:[%s6 + $0x8] sm:$0xff]
    %245 = vset.pattern.permute.xlu0 0
    %246 = vperm.xlu0 %245, %v242
    %v247 = vpop.permute.xlu0 %246
    %250 = vset.pattern.permute.xlu0 0
    %251 = vperm.xlu0 %250, %v243
    %v252 = vpop.permute.xlu0 %251
    %vm254 = vcmask 261120
    %v256 = vsel %vm254, %v240, 0
    %v259 = vsel %vm254, %v241, 0
    %261 = vmatpush.msra.mxu0 0.0
    %262 = vmatpush.msra.mxu0 0.0
    %263 = vmatpush.msra.mxu0 0.0
    %264 = vmatpush.msra.mxu0 0.0
    %265 = vmatpush.msra.mxu0 0.0
    %266 = vmatpush.msra.mxu0 0.0
    %267 = vmatpush.msra.mxu0 0.0
    %268 = vmatpush.msra.mxu0 0.0
    %269 = vmatpush.msra.mxu0 0.0
    %270 = vmatpush.msra.mxu0 0.0
    %271 = vmatpush.msra.mxu0 0.0
    %272 = vmatpush.msra.mxu0 0.0
    %273 = vmatpush.msra.mxu0 %v239
    %274 = vmatpush.msra.mxu0 %v238
    %275 = vmatpush.msra.mxu0 %v237
    %276 = vmatpush.msra.mxu0 %v236
    %277 = vmatmul.f32.gmra.mxu0 %v256
    %v278 = vpop.f32.mrf.mxu0
    %v279 = vadd.f32 %v247, %v278
    %280 = vmatmul.f32.gmra.mxu0 %v259
    %v281 = vpop.f32.mrf.mxu0
    %v282 = vadd.f32 %v252, %v281
    %283 = vdwg.mxu0
    %v284 = vmax.f32 %v279, 0.0
    %v285 = vmax.f32 %v282, 0.0
    %v286 = vld [vmem:[%s7] sm:$0xff]
    %v287 = vld [vmem:[%s7 + $0x8] sm:$0xff]
    %289 = vset.pattern.permute.xlu0 0
    %290 = vperm.xlu0 %289, %v286
    %v291 = vpop.permute.xlu0 %290
    %294 = vset.pattern.permute.xlu0 0
    %295 = vperm.xlu0 %294, %v287
    %v296 = vpop.permute.xlu0 %295
    %v298 = vmul.f32 %v284, %v291
    %v299 = vmul.f32 %v285, %v296
    %v300 = vadd.f32 %v298, %v299
    %v301 = vrot.slane %v300, 4
    %v302 = vadd.f32 %v300, %v301
    %v303 = vrot.slane %v302, 2
    %v304 = vadd.f32 %v302, %v303
    %v305 = vrot.slane %v304, 1
    %v306 = vadd.f32 %v304, %v305
    %v307 = vld [vmem:[#allocation2] sm:$0x1]
    %309 = vset.pattern.permute.xlu0 0
    %310 = vperm.xlu0 %309, %v307
    %v311 = vpop.permute.xlu0 %310
    %v313 = vperm.slane %v311, 0
    %v314 = vadd.f32 %v306, %v313
    %315 = vst [vmem:[#allocation3] sm:$0x1] %v314
    // Predicated region
    $region38: #{tpu_custom_call.1} parent=1 // pred_check
      _
    $region39: #{tpu_custom_call.1} parent=1 // pred_check_branch
      %317 = sbr.rel (0) target = $region41
    $region40: #{tpu_custom_call.1} parent=1 // pred_region
      %319 = vsyncadd [#allocation4], 0
      %s321 = sshll.u32 [#allocation3], 4
      %s322 = int_to_ptr.vmem [resolvable:$true] %s321
      %s323 = sshll.u32 %s9, 4
      %s324 = int_to_ptr.hbm [resolvable:$true] %s323
      %326 = dma.vmem_to_hbm [thread:$0]  %s322, 16, %s324, [#allocation4]
    $region41: #{tpu_custom_call.1} parent=1 // pred_fallthru
      _
    // Predicated region
    $region42: #{tpu_custom_call.1} parent=1 // pred_check
      _
    $region43: #{tpu_custom_call.1} parent=1 // pred_check_branch
      %328 = sbr.rel (0) target = $region45
    $region44: #{tpu_custom_call.1} parent=1 // pred_region
      %330 = dma.done [#allocation4], 16
    $region45: #{tpu_custom_call.1} parent=1 // pred_fallthru
      _
    %331 = vsyncpa [#allocation4], 1

</llo_original>
